<compile_context>
chip_gen: v7x
topology: tpu7x:2x2x1
jax: 0.10.0
libtpu: 0.0.40
codegen_flags: <defaults>
</compile_context>

<pallas_src>
import functools

import jax
import jax.numpy as jnp
from jax.experimental import pallas as pl
from jax.experimental.pallas import tpu as pltpu


# ------------------------------- tiling helpers --------------------------------
def _round_up(x, m):
    return ((x + m - 1) // m) * m


def _gat_tiling(n):
    """(dst_tile, src_tile, row_tile, padded_n) for the GAT kernels.

    Tile sizes are chosen against the tightest VMEM budget (v7x: 64 MiB physical,
    32 MiB scoped): a 256x512 int8 adjacency tile (128 KiB) + bf16 z + f32
    accumulators stay at a few MiB even double buffered.
    """
    if n <= 512:
        return n, n, n, n            # single tile: blocks == full dims, no padding
    tdst, tsrc, trow = 256, 512, 256
    return tdst, tsrc, trow, _round_up(n, tsrc)


# -------------------------- projection (z, attn logits) ------------------------
def _project_kernel(*refs, fuse_embed):
    if fuse_embed:
        x_ref, wpre_ref, bpre_ref, w_ref, arl_ref, z_ref, ea_ref = refs
        h = jnp.dot(x_ref[...].astype(jnp.bfloat16),
                    wpre_ref[...].astype(jnp.bfloat16),
                    preferred_element_type=jnp.float32) + bpre_ref[...]
    else:
        x_ref, w_ref, arl_ref, z_ref, ea_ref = refs
        h = x_ref[...]
    # z = h @ W  (bf16 operands, f32 accumulation)
    z = jnp.dot(h.astype(jnp.bfloat16), w_ref[...].astype(jnp.bfloat16),
                preferred_element_type=jnp.float32)
    # ea = z @ [Ar | Al] -> per-head [er | el] logits in one batched matmul (f32).
    ea_ref[...] = jnp.dot(z, arl_ref[...], preferred_element_type=jnp.float32)
    z_ref[...] = z.astype(jnp.bfloat16)


# --------------------- tiled GAT attention + aggregation -----------------------
def _gat_attention_kernel(z_ref, er_ref, elt_ref, adj_ref, bias_ref, o_ref,
                          m_sc, l_sc, acc_sc, *, num_heads, head_dim):
    j = pl.program_id(1)

    @pl.when(j == 0)
    def _():
        m_sc[...] = jnp.full(m_sc.shape, -1e30, jnp.float32)
        l_sc[...] = jnp.zeros(l_sc.shape, jnp.float32)
        acc_sc[...] = jnp.zeros(acc_sc.shape, jnp.float32)

    mask = adj_ref[...] != 0                      # int8 adjacency -> bool [TDST, TSRC]
    neg = jnp.float32(-1e30)
    er = er_ref[...]                              # [TDST, H]  (dst-side logits)
    elt = elt_ref[...]                            # [H, TSRC]  (src-side logits, lanes)
    z = z_ref[...]                                # [TSRC, H*D] bf16

    for hd in range(num_heads):
        d0 = hd * head_dim
        e = er[:, hd:hd + 1] + elt[hd:hd + 1, :]            # [TDST, TSRC]
        e = jnp.where(e > 0, e, 0.2 * e)                    # leaky relu (slope 0.2)
        e = jnp.where(mask, e, neg)                         # single mask; exp -> 0
        m_prev = m_sc[:, hd:hd + 1]
        m_new = jnp.maximum(m_prev, jnp.max(e, axis=-1, keepdims=True))
        a = jnp.exp(m_prev - m_new)                         # online-softmax rescale
        p = jnp.exp(e - m_new)                              # masked entries underflow
        l_sc[:, hd:hd + 1] = a * l_sc[:, hd:hd + 1] + jnp.sum(p, axis=-1,
                                                              keepdims=True)
        acc_sc[:, d0:d0 + head_dim] = (
            a * acc_sc[:, d0:d0 + head_dim]
            + jnp.dot(p.astype(jnp.bfloat16), z[:, d0:d0 + head_dim],
                      preferred_element_type=jnp.float32))
        m_sc[:, hd:hd + 1] = m_new

    @pl.when(j == pl.num_programs(1) - 1)
    def _():
        # deferred softmax normalization (per head), GATConv bias, ELU
        for hd in range(num_heads):
            d0 = hd * head_dim
            inv_l = pl.reciprocal(l_sc[:, hd:hd + 1], approx=True)
            acc_sc[:, d0:d0 + head_dim] = acc_sc[:, d0:d0 + head_dim] * inv_l
        out = acc_sc[...] + bias_ref[...]
        # safe ELU: clamp the exp branch so the unselected side never produces inf
        o_ref[...] = jnp.where(out > 0, out,
                               jnp.exp(jnp.minimum(out, 0.0)) - 1.0)


# ------------------------------- one GAT layer ----------------------------------
def gat_layer(h_or_x, adj_i8, w, attn_l, attn_r, bias, num_heads, head_dim,
              tiles, pre_w=None, pre_b=None):
    """One GATLayer (GATConv + ELU). If pre_w/pre_b given, the embedding linear
    (h = x @ pre_w + pre_b) is fused into the projection kernel."""
    tdst, tsrc, trow = tiles
    n = h_or_x.shape[0]
    H, D = num_heads, head_dim
    HD = H * D

    # Combined attention projection: ea = z @ [Ar | Al], Ar/Al block structured so
    # ea[:, :H] = per-head dst logits (attn_r), ea[:, H:] = per-head src logits.
    a_rl = jnp.zeros((HD, 2 * H), jnp.float32)
    for hh in range(H):
        a_rl = a_rl.at[hh * D:(hh + 1) * D, hh].set(attn_r[hh])
        a_rl = a_rl.at[hh * D:(hh + 1) * D, H + hh].set(attn_l[hh])

    fuse = pre_w is not None
    kern = functools.partial(_project_kernel, fuse_embed=fuse)
    if fuse:
        fin_x = h_or_x.shape[1]
        fin_h = pre_w.shape[1]
        inputs = (h_or_x, pre_w, pre_b.reshape(1, fin_h), w, a_rl)
        in_specs = [
            pl.BlockSpec((trow, fin_x), lambda i: (i, 0)),
            pl.BlockSpec((fin_x, fin_h), lambda i: (0, 0)),
            pl.BlockSpec((1, fin_h), lambda i: (0, 0)),
            pl.BlockSpec((fin_h, HD), lambda i: (0, 0)),
            pl.BlockSpec((HD, 2 * H), lambda i: (0, 0)),
        ]
    else:
        fin_h = h_or_x.shape[1]
        inputs = (h_or_x, w, a_rl)
        in_specs = [
            pl.BlockSpec((trow, fin_h), lambda i: (i, 0)),
            pl.BlockSpec((fin_h, HD), lambda i: (0, 0)),
            pl.BlockSpec((HD, 2 * H), lambda i: (0, 0)),
        ]

    z, ea = pl.pallas_call(
        kern,
        out_shape=(jax.ShapeDtypeStruct((n, HD), jnp.bfloat16),
                   jax.ShapeDtypeStruct((n, 2 * H), jnp.float32)),
        grid=(n // trow,),
        in_specs=in_specs,
        out_specs=[pl.BlockSpec((trow, HD), lambda i: (i, 0)),
                   pl.BlockSpec((trow, 2 * H), lambda i: (i, 0))],
        compiler_params=pltpu.CompilerParams(
            dimension_semantics=("parallel",)),
    )(*inputs)

    er = ea[:, :H]             # [n, H]  dst-side logits (nodes on sublanes)
    elt = ea[:, H:].T          # [H, n]  src-side logits (nodes on lanes)

    out = pl.pallas_call(
        functools.partial(_gat_attention_kernel, num_heads=H, head_dim=D),
        out_shape=jax.ShapeDtypeStruct((n, HD), jnp.float32),
        grid=(n // tdst, n // tsrc),
        in_specs=[
            pl.BlockSpec((tsrc, HD), lambda i, j: (j, 0)),     # z (src tile)
            pl.BlockSpec((tdst, H), lambda i, j: (i, 0)),      # er (dst tile)
            pl.BlockSpec((H, tsrc), lambda i, j: (0, j)),      # el^T (src tile)
            pl.BlockSpec((tdst, tsrc), lambda i, j: (i, j)),   # adjacency (int8)
            pl.BlockSpec((1, HD), lambda i, j: (0, 0)),        # GATConv bias
        ],
        out_specs=pl.BlockSpec((tdst, HD), lambda i, j: (i, 0)),
        scratch_shapes=[pltpu.VMEM((tdst, H), jnp.float32),    # running max m
                        pltpu.VMEM((tdst, H), jnp.float32),    # running sum l
                        pltpu.VMEM((tdst, HD), jnp.float32)],  # accumulator
        compiler_params=pltpu.CompilerParams(
            dimension_semantics=("parallel", "arbitrary"),
            vmem_limit_bytes=32 * 1024 * 1024),
    )(z, er, elt, adj_i8, bias.reshape(1, HD))
    return out


# --------------------------- edge-score projection ------------------------------
def _score_project_kernel(h_ref, w_ref, o_ref):
    o_ref[...] = jnp.dot(h_ref[...].astype(jnp.bfloat16),
                         w_ref[...].astype(jnp.bfloat16),
                         preferred_element_type=jnp.float32)


def score_project(h, w_uv, trow):
    n, d = h.shape
    c2 = w_uv.shape[1]
    return pl.pallas_call(
        _score_project_kernel,
        out_shape=jax.ShapeDtypeStruct((n, c2), jnp.float32),
        grid=(n // trow,),
        in_specs=[pl.BlockSpec((trow, d), lambda i: (i, 0)),
                  pl.BlockSpec((d, c2), lambda i: (0, 0))],
        out_specs=pl.BlockSpec((trow, c2), lambda i: (i, 0)),
        compiler_params=pltpu.CompilerParams(dimension_semantics=("parallel",)),
    )(h, w_uv)


# ------------------------------- GATEC forward ----------------------------------
def gatec_forward(params, blocks_adj, edge_src, edge_dst, input_features,
                  edge_features):
    del edge_features  # unused for the default GATLayer ('dgl') path
    n = input_features.shape[0]
    tdst, tsrc, trow, n_pad = _gat_tiling(n)

    x = input_features
    adjs = [(a > 0).astype(jnp.int8) for a in blocks_adj]   # narrow-dtype masks
    if n_pad != n:
        pad = n_pad - n
        x = jnp.pad(x, ((0, pad), (0, 0)))
        adjs = [jnp.pad(a, ((0, pad), (0, pad))) for a in adjs]

    # embedding_h is fused into layer 0's projection kernel (in_feat_dropout = id).
    h = x
    for idx, (layer_p, adj) in enumerate(zip(params["gat_layers"], adjs)):
        pre_w = params["emb_w"] if idx == 0 else None
        pre_b = params["emb_b"] if idx == 0 else None
        h = gat_layer(h, adj, layer_p["w"], layer_p["attn_l"], layer_p["attn_r"],
                      layer_p["bias"], layer_p["num_heads"], layer_p["head_dim"],
                      (tdst, tsrc, trow), pre_w=pre_w, pre_b=pre_b)

    # Edge scoring: concat(h[src], h[dst]) @ Ws + b
    #             = h[src] @ Ws_top + h[dst] @ Ws_bot + b
    # Compute both per-node projections once in Pallas, then gather + add per edge.
    out_dim = params["score_w"].shape[0] // 2
    num_classes = params["score_w"].shape[1]
    w_uv = jnp.concatenate([params["score_w"][:out_dim],
                            params["score_w"][out_dim:]], axis=1)   # [D, 2C]
    uv = score_project(h, w_uv, trow)                               # [n_pad, 2C]
    # TODO(synk): fuse this per-edge gather into the kernel via scalar-prefetched
    # edge ids + in-kernel DMA gather; for now the tiny [E, C] gather stays in XLA.
    scores = (jnp.take(uv[:, :num_classes], edge_src, axis=0)
              + jnp.take(uv[:, num_classes:], edge_dst, axis=0)
              + params["score_b"][None, :])
    return scores


# ----------------------------------- main ---------------------------------------
if __name__ == "__main__":
    key = jax.random.PRNGKey(0)
    N, E = 16, 32
    in_dim, in_dim_edge = 8, 4
    hidden_dim, out_dim = 8, 8
    n_heads, n_layers, num_classes = 2, 2, 4

    ks = jax.random.split(key, 16)

    def init(k, shape):
        return (0.1 * jax.random.normal(k, shape)).astype(jnp.float32)

    params = {
        "emb_w": init(ks[0], (in_dim, hidden_dim * n_heads)),
        "emb_b": init(ks[1], (hidden_dim * n_heads,)),
        "gat_layers": [],
        "score_w": init(ks[2], (2 * out_dim, num_classes)),
        "score_b": init(ks[3], (num_classes,)),
    }
    # n_layers-1 layers with n_heads heads, final layer with 1 head and out_dim
    layer_cfgs = [(hidden_dim * n_heads, hidden_dim, n_heads)] * (n_layers - 1) + [
        (hidden_dim * n_heads, out_dim, 1)
    ]
    kidx = 4
    for fin, dout, H in layer_cfgs:
        params["gat_layers"].append({
            "w": init(ks[kidx], (fin, H * dout)),
            "attn_l": init(ks[kidx + 1], (H, dout)),
            "attn_r": init(ks[kidx + 2], (H, dout)),
            "bias": jnp.zeros((H * dout,), jnp.float32),
            "num_heads": H,
            "head_dim": dout,
        })
        kidx += 3

    # graph blocks as dense adjacency masks [N_dst, N_src] with self loops (int8)
    blocks_adj = []
    for li in range(n_layers):
        a = jax.random.bernoulli(ks[kidx + li], 0.3, (N, N)).astype(jnp.int8)
        a = jnp.maximum(a, jnp.eye(N, dtype=jnp.int8))
        blocks_adj.append(a)

    x = jax.random.normal(ks[12], (N, in_dim), jnp.float32)
    edge_features = jax.random.normal(ks[13], (E, in_dim_edge), jnp.float32)
    edge_src = jax.random.randint(ks[14], (E,), 0, N)
    edge_dst = jax.random.randint(ks[15], (E,), 0, N)

    out = gatec_forward(params, blocks_adj, edge_src, edge_dst, x, edge_features)
    out = jax.block_until_ready(out)
    assert out.shape == (E, num_classes), out.shape
    assert bool(jnp.all(jnp.isfinite(out)))
    print("KERNEL_OK")
</pallas_src>

<mosaic_0001>
module attributes {stable_mosaic.version = 11 : i64} {
  func.func @_project_kernel(%arg0: i32, %arg1: memref<16x8xf32, #tpu.memory_space<vmem>>, %arg2: memref<8x16xf32, #tpu.memory_space<vmem>>, %arg3: memref<1x16xf32, #tpu.memory_space<vmem>>, %arg4: memref<16x16xf32, #tpu.memory_space<vmem>>, %arg5: memref<16x4xf32, #tpu.memory_space<vmem>>, %arg6: memref<16x16xbf16, #tpu.memory_space<vmem>>, %arg7: memref<16x4xf32, #tpu.memory_space<vmem>>) attributes {dimension_semantics = [#tpu.dimension_semantics<parallel>], iteration_bounds = array<i64: 1>, scalar_prefetch = 0 : i64, scratch_operands = 0 : i64, tpu.core_type = #tpu.core_type<tc>, window_params = [{transform_indices = @transform_0, window_bounds = array<i64: 16, 8>}, {pipeline_mode = #tpu.pipeline_mode<synchronous>, transform_indices = @transform_1, window_bounds = array<i64: 8, 16>}, {pipeline_mode = #tpu.pipeline_mode<synchronous>, transform_indices = @transform_2, window_bounds = array<i64: 1, 16>}, {pipeline_mode = #tpu.pipeline_mode<synchronous>, transform_indices = @transform_3, window_bounds = array<i64: 16, 16>}, {pipeline_mode = #tpu.pipeline_mode<synchronous>, transform_indices = @transform_4, window_bounds = array<i64: 16, 4>}, {transform_indices = @transform_5, window_bounds = array<i64: 16, 16>}, {transform_indices = @transform_6, window_bounds = array<i64: 16, 4>}]} {
    %c0 = arith.constant 0 : index
    %c0_0 = arith.constant 0 : index
    %0 = vector.load %arg1[%c0, %c0_0] : memref<16x8xf32, #tpu.memory_space<vmem>>, vector<16x8xf32>
    %1 = arith.truncf %0 : vector<16x8xf32> to vector<16x8xbf16>
    %c0_1 = arith.constant 0 : index
    %c0_2 = arith.constant 0 : index
    %2 = vector.load %arg2[%c0_1, %c0_2] : memref<8x16xf32, #tpu.memory_space<vmem>>, vector<8x16xf32>
    %3 = arith.truncf %2 : vector<8x16xf32> to vector<8x16xbf16>
    %cst = arith.constant dense<0.000000e+00> : vector<16x16xf32>
    %4 = tpu.matmul %1, %3, %cst {dimension_numbers = #tpu.dot_dimension_numbers<[1], [0], [0], [1], [0, 0, 1, 1], [], []>} : vector<16x8xbf16>, vector<8x16xbf16>, vector<16x16xf32> -> vector<16x16xf32>
    %c0_3 = arith.constant 0 : index
    %c0_4 = arith.constant 0 : index
    %5 = vector.load %arg3[%c0_3, %c0_4] : memref<1x16xf32, #tpu.memory_space<vmem>>, vector<1x16xf32>
    %6 = vector.broadcast %5 : vector<1x16xf32> to vector<16x16xf32>
    %7 = arith.addf %4, %6 : vector<16x16xf32>
    %8 = arith.truncf %7 : vector<16x16xf32> to vector<16x16xbf16>
    %c0_5 = arith.constant 0 : index
    %c0_6 = arith.constant 0 : index
    %9 = vector.load %arg4[%c0_5, %c0_6] : memref<16x16xf32, #tpu.memory_space<vmem>>, vector<16x16xf32>
    %10 = arith.truncf %9 : vector<16x16xf32> to vector<16x16xbf16>
    %cst_7 = arith.constant dense<0.000000e+00> : vector<16x16xf32>
    %11 = tpu.matmul %8, %10, %cst_7 {dimension_numbers = #tpu.dot_dimension_numbers<[1], [0], [0], [1], [0, 0, 1, 1], [], []>} : vector<16x16xbf16>, vector<16x16xbf16>, vector<16x16xf32> -> vector<16x16xf32>
    %c0_8 = arith.constant 0 : index
    %c0_9 = arith.constant 0 : index
    %12 = vector.load %arg5[%c0_8, %c0_9] : memref<16x4xf32, #tpu.memory_space<vmem>>, vector<16x4xf32>
    %cst_10 = arith.constant dense<0.000000e+00> : vector<16x4xf32>
    %13 = tpu.matmul %11, %12, %cst_10 {dimension_numbers = #tpu.dot_dimension_numbers<[1], [0], [0], [1], [0, 0, 1, 1], [], []>} : vector<16x16xf32>, vector<16x4xf32>, vector<16x4xf32> -> vector<16x4xf32>
    %c0_11 = arith.constant 0 : index
    %c0_12 = arith.constant 0 : index
    %14 = vector.load %arg7[%c0_11, %c0_12] : memref<16x4xf32, #tpu.memory_space<vmem>>, vector<16x4xf32>
    tpu.vector_store %arg7[%c0_11, %c0_12], %13 {strides = array<i32>} : memref<16x4xf32, #tpu.memory_space<vmem>>, vector<16x4xf32>,
    %15 = arith.truncf %11 : vector<16x16xf32> to vector<16x16xbf16>
    %c0_13 = arith.constant 0 : index
    %c0_14 = arith.constant 0 : index
    %16 = vector.load %arg6[%c0_13, %c0_14] : memref<16x16xbf16, #tpu.memory_space<vmem>>, vector<16x16xbf16>
    tpu.vector_store %arg6[%c0_13, %c0_14], %15 {strides = array<i32>} : memref<16x16xbf16, #tpu.memory_space<vmem>>, vector<16x16xbf16>,
    return
  }
  func.func @transform_0(%arg0: i32) -> (i32, i32) {
    %c0_i32 = arith.constant 0 : i32
    %c0_i32_0 = arith.constant 0 : i32
    return %arg0, %c0_i32 : i32, i32
  }
  func.func @transform_1(%arg0: i32) -> (i32, i32) {
    %c0_i32 = arith.constant 0 : i32
    %c0_i32_0 = arith.constant 0 : i32
    %c0_i32_1 = arith.constant 0 : i32
    return %c0_i32, %c0_i32_0 : i32, i32
  }
  func.func @transform_2(%arg0: i32) -> (i32, i32) {
    %c0_i32 = arith.constant 0 : i32
    %c0_i32_0 = arith.constant 0 : i32
    %c0_i32_1 = arith.constant 0 : i32
    return %c0_i32, %c0_i32_0 : i32, i32
  }
  func.func @transform_3(%arg0: i32) -> (i32, i32) {
    %c0_i32 = arith.constant 0 : i32
    %c0_i32_0 = arith.constant 0 : i32
    %c0_i32_1 = arith.constant 0 : i32
    return %c0_i32, %c0_i32_0 : i32, i32
  }
  func.func @transform_4(%arg0: i32) -> (i32, i32) {
    %c0_i32 = arith.constant 0 : i32
    %c0_i32_0 = arith.constant 0 : i32
    %c0_i32_1 = arith.constant 0 : i32
    return %c0_i32, %c0_i32_0 : i32, i32
  }
  func.func @transform_5(%arg0: i32) -> (i32, i32) {
    %c0_i32 = arith.constant 0 : i32
    %c0_i32_0 = arith.constant 0 : i32
    return %arg0, %c0_i32 : i32, i32
  }
  func.func @transform_6(%arg0: i32) -> (i32, i32) {
    %c0_i32 = arith.constant 0 : i32
    %c0_i32_0 = arith.constant 0 : i32
    return %arg0, %c0_i32 : i32, i32
  }
}

</mosaic_0001>

<llo_original>
// kernel: tpu_custom_call.1
$region0: #{tpu_custom_call.1}
  #allocation0 [shape = 'u32[]', space=smem, size = 0x4, offset = 0x4, fixed_abs, tag = 'smem constant byte address 0x4 - core index']
  #allocation1 [shape = 'u32[144,128]{1,0:T(1,128)}', space=vmem, size = 0x12000, scoped, tag = 'internal scratch']
  %s0 = inlined_call_operand.vmem [shape: f32[16,8], index: 0, kind: input, shape index: {}]
  %s1 = inlined_call_operand.vmem [shape: f32[8,16], index: 1, kind: input, shape index: {}]
  %s2 = inlined_call_operand.vmem [shape: f32[1,16], index: 2, kind: input, shape index: {}]
  %s3 = inlined_call_operand.vmem [shape: f32[16,16], index: 3, kind: input, shape index: {}]
  %s4 = inlined_call_operand.vmem [shape: f32[16,4], index: 4, kind: input, shape index: {}]
  %s5 = inlined_call_operand.hbm [shape: bf16[16,16], index: 5, kind: output, shape index: {0}]
  %s6 = inlined_call_operand.vmem [shape: f32[16,4], index: 6, kind: output, shape index: {1}]
  %7 = xla_tuple %s5, %s6
  %s8 = sld [smem:[#allocation0]]
  $region38: #{tpu_custom_call.1} parent=0
    _
  %s10 = ssub.s32 1, %s8
  %s11 = scalar_select 0, %s10, %s8
  $region1: #{tpu_custom_call.1} parent=0
    #allocation2 [shape = 'u8[4096]{0}', space=vmem, size = 0x1000, scoped, tag = 'output window, operand 0, single buffered']
    #allocation3 [shape = 's32[1]{0}', space=sflag, size = 0x4, scoped, tag = 'scoped memory for tpu_custom_call.1']
    %12 = vsyncpa [#allocation3], 0
    // Predicated region
    $region2: #{tpu_custom_call.1} parent=1 // pred_check
      _
    $region3: #{tpu_custom_call.1} parent=1 // pred_check_branch
      %14 = sbr.rel (0) target = $region5
    $region4: #{tpu_custom_call.1} parent=1 // pred_region
      _
    $region5: #{tpu_custom_call.1} parent=1 // pred_fallthru
      _
    // Predicated region
    $region6: #{tpu_custom_call.1} parent=1 // pred_check
      _
    $region7: #{tpu_custom_call.1} parent=1 // pred_check_branch
      %16 = sbr.rel (0) target = $region9
    $region8: #{tpu_custom_call.1} parent=1 // pred_region
      _
    $region9: #{tpu_custom_call.1} parent=1 // pred_fallthru
      _
    // Predicated region
    $region10: #{tpu_custom_call.1} parent=1 // pred_check
      _
    $region11: #{tpu_custom_call.1} parent=1 // pred_check_branch
      %18 = sbr.rel (0) target = $region13
    $region12: #{tpu_custom_call.1} parent=1 // pred_region
      _
    $region13: #{tpu_custom_call.1} parent=1 // pred_fallthru
      _
    // Predicated region
    $region14: #{tpu_custom_call.1} parent=1 // pred_check
      _
    $region15: #{tpu_custom_call.1} parent=1 // pred_check_branch
      %20 = sbr.rel (0) target = $region17
    $region16: #{tpu_custom_call.1} parent=1 // pred_region
      _
    $region17: #{tpu_custom_call.1} parent=1 // pred_fallthru
      _
    // Predicated region
    $region18: #{tpu_custom_call.1} parent=1 // pred_check
      _
    $region19: #{tpu_custom_call.1} parent=1 // pred_check_branch
      %22 = sbr.rel (0) target = $region21
    $region20: #{tpu_custom_call.1} parent=1 // pred_region
      _
    $region21: #{tpu_custom_call.1} parent=1 // pred_fallthru
      _
    %v24 = vld [vmem:[%s0] sm:$0xff]
    %v25 = vld [vmem:[%s0 + $0x8] sm:$0xff]
    %v26 = vpack.c.bf16 %v25, %v24
    %v27 = vld [vmem:[%s1] sm:$0xff]
    %v28 = vpack.c.bf16 %v27, %v27
    %v29 = vld [vmem:[%s2] sm:$0x1]
    %v31 = vlaneseq
    %v32 = vshrl.u32 %v31, 7
    %v33 = vsub.s32 0, %v32
    %v34 = vrot.slane %v29, %v33
    %vm36 = vcmask 64512
    %v38 = vsel %vm36, %v26, 0
    %vm40 = vcmask 1043456
    %v42 = vsel %vm40, %v28, 0
    %44 = vmatprep.subr.bf16.mxu0 0
    %45 = vmatpush1.bf16.msra.mxu0 %v42
    %46 = vmatprep.subr.bf16.mxu0 0
    %47 = vmatpush1.bf16.msra.mxu0 0
    %48 = vmatprep.subr.bf16.mxu0 0
    %49 = vmatpush1.bf16.msra.mxu0 0
    %50 = vmatprep.subr.bf16.mxu0 0
    %51 = vmatpush1.bf16.msra.mxu0 0
    %52 = vmatprep.subr.bf16.mxu0 0
    %53 = vmatpush1.bf16.msra.mxu0 0
    %54 = vmatprep.subr.bf16.mxu0 0
    %55 = vmatpush1.bf16.msra.mxu0 0
    %56 = vmatprep.subr.bf16.mxu0 0
    %57 = vmatpush1.bf16.msra.mxu0 0
    %58 = vmatprep.subr.bf16.mxu0 0
    %59 = vmatpush1.bf16.msra.mxu0 0
    %60 = vmatprep.subr.bf16.mxu0 0
    %61 = vmatpush1.bf16.msra.mxu0 0
    %62 = vmatprep.subr.bf16.mxu0 0
    %63 = vmatpush1.bf16.msra.mxu0 0
    %64 = vmatprep.subr.bf16.mxu0 0
    %65 = vmatpush1.bf16.msra.mxu0 0
    %66 = vmatprep.subr.bf16.mxu0 0
    %67 = vmatpush1.bf16.msra.mxu0 0
    %68 = vmatprep.subr.bf16.mxu0 0
    %69 = vmatpush1.bf16.msra.mxu0 0
    %70 = vmatprep.subr.bf16.mxu0 0
    %71 = vmatpush1.bf16.msra.mxu0 0
    %72 = vmatprep.subr.bf16.mxu0 0
    %73 = vmatpush1.bf16.msra.mxu0 0
    %74 = vmatprep.subr.bf16.mxu0 0
    %75 = vmatpush1.bf16.msra.mxu0 0
    %76 = vmatprep.mubr.bf16.mxu0 0
    %77 = vmatmul.mubr.bf16.gmra.mrb[0].mxu0 %v38
    %v78 = vpop.f32.mrb[0].mxu0
    %v79 = vadd.f32 %v34, %v78
    %v80 = vpop.f32.mrb[0].mxu0
    %v81 = vpop.f32.mrb[0].mxu0
    %v82 = vadd.f32 %v34, %v81
    %v83 = vpop.f32.mrb[0].mxu0
    %84 = vdwg.mxu0
    %v85 = vpack.c.bf16 %v82, %v79
    %v86 = vld [vmem:[%s3] sm:$0xff]
    %v87 = vld [vmem:[%s3 + $0x8] sm:$0xff]
    %v88 = vpack.c.bf16 %v87, %v86
    %vm89 = vcmask 130048
    %v91 = vsel %vm89, %v85, 0
    %93 = vmatprep.subr.bf16.mxu0 0
    %94 = vmatpush1.bf16.msra.mxu0 %v88
    %95 = vmatprep.subr.bf16.mxu0 0
    %96 = vmatpush1.bf16.msra.mxu0 0
    %97 = vmatprep.subr.bf16.mxu0 0
    %98 = vmatpush1.bf16.msra.mxu0 0
    %99 = vmatprep.subr.bf16.mxu0 0
    %100 = vmatpush1.bf16.msra.mxu0 0
    %101 = vmatprep.subr.bf16.mxu0 0
    %102 = vmatpush1.bf16.msra.mxu0 0
    %103 = vmatprep.subr.bf16.mxu0 0
    %104 = vmatpush1.bf16.msra.mxu0 0
    %105 = vmatprep.subr.bf16.mxu0 0
    %106 = vmatpush1.bf16.msra.mxu0 0
    %107 = vmatprep.subr.bf16.mxu0 0
    %108 = vmatpush1.bf16.msra.mxu0 0
    %109 = vmatprep.subr.bf16.mxu0 0
    %110 = vmatpush1.bf16.msra.mxu0 0
    %111 = vmatprep.subr.bf16.mxu0 0
    %112 = vmatpush1.bf16.msra.mxu0 0
    %113 = vmatprep.subr.bf16.mxu0 0
    %114 = vmatpush1.bf16.msra.mxu0 0
    %115 = vmatprep.subr.bf16.mxu0 0
    %116 = vmatpush1.bf16.msra.mxu0 0
    %117 = vmatprep.subr.bf16.mxu0 0
    %118 = vmatpush1.bf16.msra.mxu0 0
    %119 = vmatprep.subr.bf16.mxu0 0
    %120 = vmatpush1.bf16.msra.mxu0 0
    %121 = vmatprep.subr.bf16.mxu0 0
    %122 = vmatpush1.bf16.msra.mxu0 0
    %123 = vmatprep.subr.bf16.mxu0 0
    %124 = vmatpush1.bf16.msra.mxu0 0
    %125 = vmatprep.mubr.bf16.mxu0 0
    %126 = vmatmul.mubr.bf16.gmra.mrb[0].mxu0 %v91
    %v127 = vpop.f32.mrb[0].mxu0
    %v128 = vadd.f32 0.0, %v127
    %v129 = vpop.f32.mrb[0].mxu0
    %v130 = vpop.f32.mrb[0].mxu0
    %v131 = vadd.f32 0.0, %v130
    %v132 = vpop.f32.mrb[0].mxu0
    %133 = vdwg.mxu0
    %v134 = vld [vmem:[%s4] sm:$0xff]
    %v135 = vld [vmem:[%s4 + $0x8] sm:$0xff]
    %v137 = vsel %vm89, %v128, 0
    %v140 = vsel %vm89, %v131, 0
    %142 = vmatprep.subr.mxu0 0.0
    %143 = vmatpush1.msra.mxu0 %v134
    %144 = vmatprep.subr.mxu0 0.0
    %145 = vmatpush1.msra.mxu0 %v135
    %146 = vmatprep.subr.mxu0 0.0
    %147 = vmatpush1.msra.mxu0 0.0
    %148 = vmatprep.subr.mxu0 0.0
    %149 = vmatpush1.msra.mxu0 0.0
    %150 = vmatprep.subr.mxu0 0.0
    %151 = vmatpush1.msra.mxu0 0.0
    %152 = vmatprep.subr.mxu0 0.0
    %153 = vmatpush1.msra.mxu0 0.0
    %154 = vmatprep.subr.mxu0 0.0
    %155 = vmatpush1.msra.mxu0 0.0
    %156 = vmatprep.subr.mxu0 0.0
    %157 = vmatpush1.msra.mxu0 0.0
    %158 = vmatprep.subr.mxu0 0.0
    %159 = vmatpush1.msra.mxu0 0.0
    %160 = vmatprep.subr.mxu0 0.0
    %161 = vmatpush1.msra.mxu0 0.0
    %162 = vmatprep.subr.mxu0 0.0
    %163 = vmatpush1.msra.mxu0 0.0
    %164 = vmatprep.subr.mxu0 0.0
    %165 = vmatpush1.msra.mxu0 0.0
    %166 = vmatprep.subr.mxu0 0.0
    %167 = vmatpush1.msra.mxu0 0.0
    %168 = vmatprep.subr.mxu0 0.0
    %169 = vmatpush1.msra.mxu0 0.0
    %170 = vmatprep.subr.mxu0 0.0
    %171 = vmatpush1.msra.mxu0 0.0
    %172 = vmatprep.subr.mxu0 0.0
    %173 = vmatpush1.msra.mxu0 0.0
    %174 = vmatprep.subr.mxu0 0.0
    %175 = vmatpush1.msra.mxu0 0.0
    %176 = vmatprep.subr.mxu0 0.0
    %177 = vmatpush1.msra.mxu0 0.0
    %178 = vmatprep.subr.mxu0 0.0
    %179 = vmatpush1.msra.mxu0 0.0
    %180 = vmatprep.subr.mxu0 0.0
    %181 = vmatpush1.msra.mxu0 0.0
    %182 = vmatprep.subr.mxu0 0.0
    %183 = vmatpush1.msra.mxu0 0.0
    %184 = vmatprep.subr.mxu0 0.0
    %185 = vmatpush1.msra.mxu0 0.0
    %186 = vmatprep.subr.mxu0 0.0
    %187 = vmatpush1.msra.mxu0 0.0
    %188 = vmatprep.subr.mxu0 0.0
    %189 = vmatpush1.msra.mxu0 0.0
    %190 = vmatprep.subr.mxu0 0.0
    %191 = vmatpush1.msra.mxu0 0.0
    %192 = vmatprep.subr.mxu0 0.0
    %193 = vmatpush1.msra.mxu0 0.0
    %194 = vmatprep.subr.mxu0 0.0
    %195 = vmatpush1.msra.mxu0 0.0
    %196 = vmatprep.subr.mxu0 0.0
    %197 = vmatpush1.msra.mxu0 0.0
    %198 = vmatprep.subr.mxu0 0.0
    %199 = vmatpush1.msra.mxu0 0.0
    %200 = vmatprep.subr.mxu0 0.0
    %201 = vmatpush1.msra.mxu0 0.0
    %202 = vmatprep.subr.mxu0 0.0
    %203 = vmatpush1.msra.mxu0 0.0
    %204 = vmatprep.subr.mxu0 0.0
    %205 = vmatpush1.msra.mxu0 0.0
    %206 = vmatprep.mubr.f32.mxu0 0.0
    %207 = vmatmul.mubr.f32.gmra.mrb[0].mxu0 %v137
    %v208 = vpop.f32.mrb[0].mxu0
    %v209 = vadd.f32 0.0, %v208
    %v210 = vpop.f32.mrb[0].mxu0
    %211 = vmatprep.mubr.f32.mxu0 0.0
    %212 = vmatmul.mubr.f32.gmra.mrb[0].mxu0 %v140
    %v213 = vpop.f32.mrb[0].mxu0
    %v214 = vadd.f32 0.0, %v213
    %v215 = vpop.f32.mrb[0].mxu0
    %216 = vdwg.mxu0
    %vm217 = vcmask 31744
    %218 = vst.msk [vmem:[%s6] sm:$0xff] %vm217, %v209
    %219 = vst.msk [vmem:[%s6 + $0x8] sm:$0xff] %vm217, %v214
    %v220 = vpack.c.bf16 %v131, %v128
    %v222 = vunpack.c.l.b16 %v220
    %v223 = vunpack.c.h.b16 %v220
    %v224 = vpack.c.b16 %v222, %v222
    %v225 = vpack.c.b16 %v223, %v223
    %vm228 = vcmask 125952
    %229 = vst.msk [vmem:[#allocation2] sm:$0xf] %vm228, %v224
    %230 = vst.msk [vmem:[#allocation2 + $0x4] sm:$0xf] %vm228, %v225
    // Predicated region
    $region22: #{tpu_custom_call.1} parent=1 // pred_check
      _
    $region23: #{tpu_custom_call.1} parent=1 // pred_check_branch
      %232 = sbr.rel (0) target = $region25
    $region24: #{tpu_custom_call.1} parent=1 // pred_region
      %s234 = ssub.s32 128, 128
      %235 = vsyncadd [#allocation3], %s234
      %s236 = sshll.u32 [#allocation2], 4
      %s237 = int_to_ptr.vmem [resolvable:$true] %s236
      %242 = dma.vmem_to_hbm [thread:$0]  %s237, 128, %s5, [#allocation3], 64, 64, 4
    $region25: #{tpu_custom_call.1} parent=1 // pred_fallthru
      _
    // Predicated region
    $region26: #{tpu_custom_call.1} parent=1 // pred_check
      _
    $region27: #{tpu_custom_call.1} parent=1 // pred_check_branch
      %244 = sbr.rel (0) target = $region29
    $region28: #{tpu_custom_call.1} parent=1 // pred_region
      _
    $region29: #{tpu_custom_call.1} parent=1 // pred_fallthru
      _
    // Predicated region
    $region30: #{tpu_custom_call.1} parent=1 // pred_check
      _
    $region31: #{tpu_custom_call.1} parent=1 // pred_check_branch
      %246 = sbr.rel (0) target = $region33
    $region32: #{tpu_custom_call.1} parent=1 // pred_region
      %247 = dma.done [#allocation3], 128
    $region33: #{tpu_custom_call.1} parent=1 // pred_fallthru
      _
    // Predicated region
    $region34: #{tpu_custom_call.1} parent=1 // pred_check
      _
    $region35: #{tpu_custom_call.1} parent=1 // pred_check_branch
      %249 = sbr.rel (0) target = $region37
    $region36: #{tpu_custom_call.1} parent=1 // pred_region
      _
    $region37: #{tpu_custom_call.1} parent=1 // pred_fallthru
      _
    %250 = vsyncpa [#allocation3], 1

</llo_original>
